<compile_context>
chip_gen: v6e
topology: v6e:2x2x1
jax: 0.10.0
libtpu: 0.0.40
codegen_flags: <defaults>
</compile_context>

<pallas_src>
import functools

import jax
import jax.numpy as jnp
from jax import lax
from jax.experimental import pallas as pl
from jax.experimental.pallas import tpu as pltpu

LANES = 128
SUBLANES = 8
NCORES = 2  # leading 'parallel' grid axis for the reduction path (v7x megacore)
VMEM_LIMIT_BYTES = 32 * 1024 * 1024


def _modified_huber(x_f32, t_f32):
    z = (2.0 * t_f32 - 1.0) * x_f32
    return jnp.where(z < -1.0, -4.0 * z, (1.0 - z) ** 2)


def _mhuber_reduce_kernel(x_ref, t_ref, out_ref, acc_ref, *, n, tr, steps_per_core):
    c = pl.program_id(0)
    s = pl.program_id(1)

    @pl.when(s == 0)
    def _():
        acc_ref[...] = jnp.zeros_like(acc_ref)

    x = x_ref[...].astype(jnp.float32)
    t = t_ref[...].astype(jnp.float32)
    loss = _modified_huber(x, t)

    # In-kernel validity mask for the padded tail (no mask input stream).
    row0 = (c * steps_per_core + s) * tr
    rows = row0 + lax.broadcasted_iota(jnp.int32, (tr, LANES), 0)
    lanes = lax.broadcasted_iota(jnp.int32, (tr, LANES), 1)
    full_rows = n // LANES
    tail_lanes = n % LANES
    valid = (rows < full_rows) | ((rows == full_rows) & (lanes < tail_lanes))
    loss = jnp.where(valid, loss, 0.0)

    # Pure VPU accumulation into an (8,128) partial-sum vector; no per-step
    # cross-lane reduce, no per-step scalar dependency.
    acc_ref[...] += loss.reshape(tr // SUBLANES, SUBLANES, LANES).sum(axis=0)

    @pl.when(s == pl.num_programs(1) - 1)
    def _():
        out_ref[...] = acc_ref[...]


def _mhuber_elementwise_kernel(x_ref, t_ref, o_ref):
    x = x_ref[...].astype(jnp.float32)
    t = t_ref[...].astype(jnp.float32)
    o_ref[...] = _modified_huber(x, t).astype(o_ref.dtype)


def modified_huber_loss(inputs, targets, reduction="mean", tile_rows=512):
    """JAX/Pallas equivalent of ModifiedHuberLoss.forward."""
    orig_shape = inputs.shape
    n = int(inputs.size)

    out_dtype = jnp.result_type(inputs.dtype, targets.dtype)
    if not jnp.issubdtype(out_dtype, jnp.floating):
        out_dtype = jnp.float32

    # Lane-dense 2-D slab in native dtype; tile rows rounded, never shrunk.
    rows = max(pl.cdiv(n, LANES), 1)
    tr = min(int(tile_rows), pl.cdiv(rows, SUBLANES) * SUBLANES)
    tr = pl.cdiv(tr, SUBLANES) * SUBLANES
    total_tiles = pl.cdiv(rows, tr)

    def _pad_to(arr, rows_padded):
        n_padded = rows_padded * LANES
        flat = jnp.pad(arr.reshape(-1), (0, n_padded - n))
        return flat.reshape(rows_padded, LANES)

    if reduction in ("mean", "sum"):
        total_tiles_r = pl.cdiv(total_tiles, NCORES) * NCORES
        steps_per_core = total_tiles_r // NCORES
        rows_padded = total_tiles_r * tr

        x2 = _pad_to(inputs, rows_padded)
        t2 = _pad_to(targets, rows_padded)

        kernel = functools.partial(
            _mhuber_reduce_kernel, n=n, tr=tr, steps_per_core=steps_per_core)

        in_map = lambda c, s: (c * steps_per_core + s, 0)
        partials = pl.pallas_call(
            kernel,
            out_shape=jax.ShapeDtypeStruct((NCORES * SUBLANES, LANES), jnp.float32),
            grid_spec=pltpu.PrefetchScalarGridSpec(
                num_scalar_prefetch=0,
                grid=(NCORES, steps_per_core),
                in_specs=[
                    pl.BlockSpec((tr, LANES), in_map),
                    pl.BlockSpec((tr, LANES), in_map),
                ],
                out_specs=pl.BlockSpec((SUBLANES, LANES), lambda c, s: (c, 0)),
                scratch_shapes=[pltpu.VMEM((SUBLANES, LANES), jnp.float32)],
            ),
            compiler_params=pltpu.CompilerParams(
                dimension_semantics=("parallel", "arbitrary"),
                vmem_limit_bytes=VMEM_LIMIT_BYTES),
        )(x2, t2)

        total = jnp.sum(partials)  # tiny (16,128) cross-lane reduce in XLA
        if reduction == "mean":
            total = total / jnp.float32(n)
        return total.astype(out_dtype)

    # reduction is None / 'none': elementwise output in native dtype.
    rows_padded = total_tiles * tr
    x2 = _pad_to(inputs, rows_padded)
    t2 = _pad_to(targets, rows_padded)

    out2 = pl.pallas_call(
        _mhuber_elementwise_kernel,
        out_shape=jax.ShapeDtypeStruct((rows_padded, LANES), out_dtype),
        grid_spec=pltpu.PrefetchScalarGridSpec(
            num_scalar_prefetch=0,
            grid=(total_tiles,),
            in_specs=[
                pl.BlockSpec((tr, LANES), lambda i: (i, 0)),
                pl.BlockSpec((tr, LANES), lambda i: (i, 0)),
            ],
            out_specs=pl.BlockSpec((tr, LANES), lambda i: (i, 0)),
        ),
        compiler_params=pltpu.CompilerParams(
            dimension_semantics=("parallel",),
            vmem_limit_bytes=VMEM_LIMIT_BYTES),
    )(x2, t2)
    return out2.reshape(-1)[:n].reshape(orig_shape)


def _reference(inputs, targets, reduction):
    x = inputs.astype(jnp.float32)
    t = 2.0 * targets.astype(jnp.float32) - 1.0
    z = t * x
    loss = jnp.where(z < -1.0, -4.0 * z, (1.0 - z) ** 2)
    if reduction == "mean":
        return loss.mean()
    elif reduction == "sum":
        return loss.sum()
    return loss


if __name__ == "__main__":
    key = jax.random.PRNGKey(0)
    k1, k2 = jax.random.split(key)

    # Small NCHW-style logits/targets consistent with binary classification use.
    shape = (2, 4, 16, 16)
    logits = jax.random.normal(k1, shape, dtype=jnp.float32) * 2.0
    targets = (jax.random.uniform(k2, shape) > 0.5).astype(jnp.float32)

    out_mean = jax.block_until_ready(
        modified_huber_loss(logits, targets, reduction="mean"))
    out_sum = jax.block_until_ready(
        modified_huber_loss(logits, targets, reduction="sum"))
    out_none = jax.block_until_ready(
        modified_huber_loss(logits, targets, reduction=None))

    ref_mean = _reference(logits, targets, "mean")
    ref_sum = _reference(logits, targets, "sum")
    ref_none = _reference(logits, targets, None)

    assert jnp.allclose(out_mean, ref_mean, rtol=1e-5, atol=1e-5), (out_mean, ref_mean)
    assert jnp.allclose(out_sum, ref_sum, rtol=1e-5, atol=1e-4), (out_sum, ref_sum)
    assert out_none.shape == shape
    assert jnp.allclose(out_none, ref_none, rtol=1e-5, atol=1e-5)

    print("KERNEL_OK")
</pallas_src>

<mosaic_0001>
module attributes {stable_mosaic.version = 11 : i64} {
  func.func @_mhuber_reduce_kernel(%arg0: i32, %arg1: i32, %arg2: memref<16x128xf32, #tpu.memory_space<vmem>>, %arg3: memref<16x128xf32, #tpu.memory_space<vmem>>, %arg4: memref<8x128xf32, #tpu.memory_space<vmem>>, %arg5: memref<8x128xf32, #tpu.memory_space<vmem>>) attributes {dimension_semantics = [#tpu.dimension_semantics<parallel>, #tpu.dimension_semantics<arbitrary>], iteration_bounds = array<i64: 2, 1>, scalar_prefetch = 0 : i64, scratch_operands = 1 : i64, tpu.core_type = #tpu.core_type<tc>, window_params = [{transform_indices = @transform_0, window_bounds = array<i64: 16, 128>}, {transform_indices = @transform_1, window_bounds = array<i64: 16, 128>}, {transform_indices = @transform_2, window_bounds = array<i64: 8, 128>}]} {
    %c0_i32 = arith.constant 0 : i32
    %0 = arith.cmpi eq, %arg1, %c0_i32 : i32
    %1 = arith.extui %0 : i1 to i32
    %c0_i32_0 = arith.constant 0 : i32
    %2 = arith.cmpi ne, %1, %c0_i32_0 : i32
    scf.if %2 {
      %cst_19 = arith.constant 0.000000e+00 : f32
      %43 = vector.broadcast %cst_19 : f32 to vector<8x128xf32>
      %c0_20 = arith.constant 0 : index
      %c0_21 = arith.constant 0 : index
      %44 = vector.load %arg5[%c0_20, %c0_21] : memref<8x128xf32, #tpu.memory_space<vmem>>, vector<8x128xf32>
      tpu.vector_store %arg5[%c0_20, %c0_21], %43 {strides = array<i32>} : memref<8x128xf32, #tpu.memory_space<vmem>>, vector<8x128xf32>,
    } else {
    }
    %c0 = arith.constant 0 : index
    %c0_1 = arith.constant 0 : index
    %3 = vector.load %arg2[%c0, %c0_1] : memref<16x128xf32, #tpu.memory_space<vmem>>, vector<16x128xf32>
    %c0_2 = arith.constant 0 : index
    %c0_3 = arith.constant 0 : index
    %4 = vector.load %arg3[%c0_2, %c0_3] : memref<16x128xf32, #tpu.memory_space<vmem>>, vector<16x128xf32>
    %cst = arith.constant 2.000000e+00 : f32
    %5 = vector.broadcast %cst : f32 to vector<16x128xf32>
    %6 = arith.mulf %5, %4 : vector<16x128xf32>
    %cst_4 = arith.constant 1.000000e+00 : f32
    %7 = vector.broadcast %cst_4 : f32 to vector<16x128xf32>
    %8 = arith.subf %6, %7 : vector<16x128xf32>
    %9 = arith.mulf %8, %3 : vector<16x128xf32>
    %cst_5 = arith.constant -1.000000e+00 : f32
    %10 = vector.broadcast %cst_5 : f32 to vector<16x128xf32>
    %11 = arith.cmpf olt, %9, %10 : vector<16x128xf32>
    %cst_6 = arith.constant -4.000000e+00 : f32
    %12 = vector.broadcast %cst_6 : f32 to vector<16x128xf32>
    %13 = arith.mulf %12, %9 : vector<16x128xf32>
    %cst_7 = arith.constant 1.000000e+00 : f32
    %14 = vector.broadcast %cst_7 : f32 to vector<16x128xf32>
    %15 = arith.subf %14, %9 : vector<16x128xf32>
    %16 = arith.mulf %15, %15 : vector<16x128xf32>
    %17 = arith.select %11, %13, %16 : vector<16x128xi1>, vector<16x128xf32>
    %c1_i32 = arith.constant 1 : i32
    %18 = arith.muli %arg0, %c1_i32 : i32
    %19 = arith.addi %18, %arg1 : i32
    %c16_i32 = arith.constant 16 : i32
    %20 = arith.muli %19, %c16_i32 : i32
    %21 = tpu.iota {dimensions = array<i32: 0>} : vector<16x128xi32>
    %22 = vector.broadcast %20 : i32 to vector<16x128xi32>
    %23 = arith.addi %22, %21 : vector<16x128xi32>
    %24 = tpu.iota {dimensions = array<i32: 1>} : vector<16x128xi32>
    %c16_i32_8 = arith.constant 16 : i32
    %25 = vector.broadcast %c16_i32_8 : i32 to vector<16x128xi32>
    %26 = arith.cmpi slt, %23, %25 : vector<16x128xi32>
    %c16_i32_9 = arith.constant 16 : i32
    %27 = vector.broadcast %c16_i32_9 : i32 to vector<16x128xi32>
    %28 = arith.cmpi eq, %23, %27 : vector<16x128xi32>
    %c0_i32_10 = arith.constant 0 : i32
    %29 = vector.broadcast %c0_i32_10 : i32 to vector<16x128xi32>
    %30 = arith.cmpi slt, %24, %29 : vector<16x128xi32>
    %31 = arith.andi %28, %30 : vector<16x128xi1>
    %32 = arith.ori %26, %31 : vector<16x128xi1>
    %cst_11 = arith.constant 0.000000e+00 : f32
    %33 = vector.broadcast %cst_11 : f32 to vector<16x128xf32>
    %34 = arith.select %32, %17, %33 : vector<16x128xi1>, vector<16x128xf32>
    %c0_12 = arith.constant 0 : index
    %c0_13 = arith.constant 0 : index
    %35 = vector.load %arg5[%c0_12, %c0_13] : memref<8x128xf32, #tpu.memory_space<vmem>>, vector<8x128xf32>
    %36 = vector.shape_cast %34 : vector<16x128xf32> to vector<2x8x128xf32>
    %cst_14 = arith.constant dense<0.000000e+00> : vector<8x128xf32>
    %37 = vector.multi_reduction <add>, %36, %cst_14 [0] : vector<2x8x128xf32> to vector<8x128xf32>
    %38 = arith.addf %35, %37 : vector<8x128xf32>
    %c0_15 = arith.constant 0 : index
    %c0_16 = arith.constant 0 : index
    %39 = vector.load %arg5[%c0_15, %c0_16] : memref<8x128xf32, #tpu.memory_space<vmem>>, vector<8x128xf32>
    tpu.vector_store %arg5[%c0_15, %c0_16], %38 {strides = array<i32>} : memref<8x128xf32, #tpu.memory_space<vmem>>, vector<8x128xf32>,
    %c0_i32_17 = arith.constant 0 : i32
    %40 = arith.cmpi eq, %arg1, %c0_i32_17 : i32
    %41 = arith.extui %40 : i1 to i32
    %c0_i32_18 = arith.constant 0 : i32
    %42 = arith.cmpi ne, %41, %c0_i32_18 : i32
    scf.if %42 {
      %c0_19 = arith.constant 0 : index
      %c0_20 = arith.constant 0 : index
      %43 = vector.load %arg5[%c0_19, %c0_20] : memref<8x128xf32, #tpu.memory_space<vmem>>, vector<8x128xf32>
      %c0_21 = arith.constant 0 : index
      %c0_22 = arith.constant 0 : index
      %44 = vector.load %arg4[%c0_21, %c0_22] : memref<8x128xf32, #tpu.memory_space<vmem>>, vector<8x128xf32>
      tpu.vector_store %arg4[%c0_21, %c0_22], %43 {strides = array<i32>} : memref<8x128xf32, #tpu.memory_space<vmem>>, vector<8x128xf32>,
    } else {
    }
    return
  }
  func.func @transform_0(%arg0: i32, %arg1: i32) -> (i32, i32) {
    %c1_i32 = arith.constant 1 : i32
    %0 = arith.muli %arg0, %c1_i32 : i32
    %1 = arith.addi %0, %arg1 : i32
    %c0_i32 = arith.constant 0 : i32
    %c0_i32_0 = arith.constant 0 : i32
    return %1, %c0_i32 : i32, i32
  }
  func.func @transform_1(%arg0: i32, %arg1: i32) -> (i32, i32) {
    %c1_i32 = arith.constant 1 : i32
    %0 = arith.muli %arg0, %c1_i32 : i32
    %1 = arith.addi %0, %arg1 : i32
    %c0_i32 = arith.constant 0 : i32
    %c0_i32_0 = arith.constant 0 : i32
    return %1, %c0_i32 : i32, i32
  }
  func.func @transform_2(%arg0: i32, %arg1: i32) -> (i32, i32) {
    %c0_i32 = arith.constant 0 : i32
    %c0_i32_0 = arith.constant 0 : i32
    return %arg0, %c0_i32 : i32, i32
  }
}

</mosaic_0001>

<llo_original>
// kernel: tpu_custom_call.1
$region0: #{tpu_custom_call.1}
  #allocation0 [shape = 'u32[]', space=smem, size = 0x4, offset = 0x4, fixed_abs, tag = 'smem constant byte address 0x4 - core index']
  #allocation1 [shape = 'u32[144,128]{1,0:T(1,128)}', space=vmem, size = 0x12000, scoped, tag = 'internal scratch']
  #allocation2 [shape = 'f32[8,128]{1,0:T(8,128)}', space=vmem, size = 0x1000, scoped, tag = 'scratch operand']
  %s0 = inlined_call_operand.hbm [shape: f32[32,128], index: 0, kind: input, shape index: {}]
  %s1 = inlined_call_operand.hbm [shape: f32[32,128], index: 1, kind: input, shape index: {}]
  %s2 = inlined_call_operand.hbm [shape: f32[16,128], index: 2, kind: output, shape index: {}]
  %s3 = sld [smem:[#allocation0]]
  $region57: #{tpu_custom_call.1} parent=0
    _
  %s5 = ssub.s32 1, %s3
  %s6 = scalar_select 0, %s5, %s3
  $region1: #{tpu_custom_call.1} parent=0
    #allocation3 [shape = 'u8[16384]{0}', space=vmem, size = 0x4000, scoped, tag = 'input window, operand 0']
    #allocation4 [shape = 's32[2]{0}', space=sflag, size = 0x8, scoped, tag = 'scoped memory for tpu_custom_call.1']
    #allocation5 [shape = 's32[2]{0}', space=sflag, size = 0x8, scoped, tag = 'scoped memory for tpu_custom_call.1']
    #allocation6 [shape = 'u8[16384]{0}', space=vmem, size = 0x4000, scoped, tag = 'input window, operand 1']
    #allocation7 [shape = 's32[2]{0}', space=sflag, size = 0x8, scoped, tag = 'scoped memory for tpu_custom_call.1']
    #allocation8 [shape = 'u8[8192]{0}', space=vmem, size = 0x2000, scoped, tag = 'output window, operand 0']
    %7 = vsyncpa [#allocation4], 0
    %s8 = scalar_lea.sflag [#allocation4], 1
    %9 = vsyncpa %s8, 0
    %10 = vsyncpa [#allocation7], 0
    %s11 = scalar_lea.sflag [#allocation7], 1
    %12 = vsyncpa %s11, 0
    %13 = vsyncpa [#allocation5], 0
    %s14 = scalar_lea.sflag [#allocation5], 1
    %15 = vsyncpa %s14, 0
    loop: start=0, step=1, limit=4
    $region2: #{tpu_custom_call.1} parent=1 // loop_pre_header
      _
    $region3: #{tpu_custom_call.1} parent=1 // loop_header
      %s17 = sphi 0, %s21
      %p18 = scmp.ge.s32.totalorder %s17, 4
      %s24 = sphi 0, %s36
      %s25 = sphi 0, %s32
      %s26 = sphi 0, %s24
      %s27 = sphi 0, %s25
      %s28 = sphi 0, %s26
      %s29 = sphi 0, %s27
      %s41 = sphi 0, %s43
      %s44 = sphi 0, %s41
      %s45 = sphi 0, %s44
      %s61 = sphi 0, %s45
      %s69 = sphi 0, %s71
      %s72 = sphi 0, %s69
      %s73 = sphi 0, %s72
      %s89 = sphi 0, %s73
      %s95 = sphi 0, %s97
      %s98 = sphi 0, %s95
      %s99 = sphi 0, %s98
      %s115 = sphi 0, %s99
    $region4: #{tpu_custom_call.1} parent=1 // loop_header_branch
      %20 = sbr.rel (%p18) target = $region8
    $region5: #{tpu_custom_call.1} parent=1 // loop_body
      %s22 = ssub.s32 %s17, 1
      %s23 = ssub.s32 %s17, 2
      %s30 = sadd.s32 1, %s25
      %p31 = scmp.ge.s32.totalorder %s30, 1
      %s32 = scalar_select %p31, 0, %s30
      %s33 = sadd.s32 1, %s24
      %s34 = scalar_select %p31, %s33, %s24
      %p35 = scmp.ge.s32.totalorder %s34, 2
      %s36 = scalar_select %p35, 0, %s34
      %s37 = sadd.s32 %s24, %s25
      %s38 = sadd.s32 %s36, %s32
      %s39 = ssub.s32 %s37, %s38
      %p40 = scmp.eq.s32.totalorder %s39, 0
      %s42 = sadd.s32 %s41, 1
      %s43 = scalar_select %p40, %s41, %s42
      %p46 = pneg %p40
      %p47 = scmp.eq.s32.totalorder %s17, 1
      %p48 = por %p46, %p47
      %p49 = scmp.ne.s32.totalorder %s41, %s44
      %p50 = scmp.eq.s32.totalorder %s17, 0
      %p51 = por %p49, %p50
      %p52 = scmp.ne.s32.totalorder %s41, %s44
      %p53 = scmp.eq.s32.totalorder %s22, 1
      %p54 = por %p52, %p53
      %p55 = scmp.ne.s32.totalorder %s44, %s45
      %p56 = scmp.eq.s32.totalorder %s22, 0
      %p57 = por %p55, %p56
      %p58 = scmp.ne.s32.totalorder %s44, %s45
      %p59 = scmp.eq.s32.totalorder %s23, 1
      %p60 = por %p58, %p59
      %p62 = scmp.ne.s32.totalorder %s45, %s61
      %p63 = scmp.eq.s32.totalorder %s23, 0
      %p64 = por %p62, %p63
      %s65 = sadd.s32 %s24, %s25
      %s66 = sadd.s32 %s36, %s32
      %s67 = ssub.s32 %s65, %s66
      %p68 = scmp.eq.s32.totalorder %s67, 0
      %s70 = sadd.s32 %s69, 1
      %s71 = scalar_select %p68, %s69, %s70
      %p74 = pneg %p68
      %p75 = scmp.eq.s32.totalorder %s17, 1
      %p76 = por %p74, %p75
      %p77 = scmp.ne.s32.totalorder %s69, %s72
      %p78 = scmp.eq.s32.totalorder %s17, 0
      %p79 = por %p77, %p78
      %p80 = scmp.ne.s32.totalorder %s69, %s72
      %p81 = scmp.eq.s32.totalorder %s22, 1
      %p82 = por %p80, %p81
      %p83 = scmp.ne.s32.totalorder %s72, %s73
      %p84 = scmp.eq.s32.totalorder %s22, 0
      %p85 = por %p83, %p84
      %p86 = scmp.ne.s32.totalorder %s72, %s73
      %p87 = scmp.eq.s32.totalorder %s23, 1
      %p88 = por %p86, %p87
      %p90 = scmp.ne.s32.totalorder %s73, %s89
      %p91 = scmp.eq.s32.totalorder %s23, 0
      %p92 = por %p90, %p91
      %s93 = ssub.s32 %s24, %s36
      %p94 = scmp.eq.s32.totalorder %s93, 0
      %s96 = sadd.s32 %s95, 1
      %s97 = scalar_select %p94, %s95, %s96
      %p100 = pneg %p94
      %p101 = scmp.eq.s32.totalorder %s17, 1
      %p102 = por %p100, %p101
      %p103 = scmp.ne.s32.totalorder %s95, %s98
      %p104 = scmp.eq.s32.totalorder %s17, 0
      %p105 = por %p103, %p104
      %p106 = scmp.ne.s32.totalorder %s95, %s98
      %p107 = scmp.eq.s32.totalorder %s22, 1
      %p108 = por %p106, %p107
      %p109 = scmp.ne.s32.totalorder %s98, %s99
      %p110 = scmp.eq.s32.totalorder %s22, 0
      %p111 = por %p109, %p110
      %p112 = scmp.ne.s32.totalorder %s98, %s99
      %p113 = scmp.eq.s32.totalorder %s23, 1
      %p114 = por %p112, %p113
      %p116 = scmp.ne.s32.totalorder %s99, %s115
      %p117 = scmp.eq.s32.totalorder %s23, 0
      %p118 = por %p116, %p117
      %p119 = scmp.le.s32.totalorder 1, %s17
      %p120 = scmp.lt.s32.totalorder %s17, 3
      %p121 = pnand %p119, %p120
      %p122 = pneg %p121
      // Predicated region
      $region9: #{tpu_custom_call.1} parent=5 // pred_check
        _
      $region10: #{tpu_custom_call.1} parent=5 // pred_check_branch
        %124 = sbr.rel (%p121) target = $region12
      $region11: #{tpu_custom_call.1} parent=5 // pred_region
        %s125 = ssub.s32 %s17, 1
      $region12: #{tpu_custom_call.1} parent=5 // pred_fallthru
        _
      %p126 = scmp.lt.s32.totalorder %s17, 2
      // Predicated region
      $region13: #{tpu_custom_call.1} parent=5 // pred_check
        %p127 = pneg %p126
      $region14: #{tpu_custom_call.1} parent=5 // pred_check_branch
        %129 = sbr.rel (%p127) target = $region16
      $region15: #{tpu_custom_call.1} parent=5 // pred_region
        // Predicated region
        $region17: #{tpu_custom_call.1} parent=15 // pred_check
          %p130 = pneg %p51
        $region18: #{tpu_custom_call.1} parent=15 // pred_check_branch
          %132 = sbr.rel (%p130) target = $region20
        $region19: #{tpu_custom_call.1} parent=15 // pred_region
          %s133 = sand.u32 %s41, 1
          %s134 = scalar_lea.sflag [#allocation4], %s133
          %s135 = sand.u32 %s41, 1
          %s136 = smul.addr %s135, 16
          %s137 = scalar_lea.vmem [#allocation3], %s136
          %s138 = sadd.s32 %s24, %s25
          %s139 = smul.u32 2, %s138
          %s141 = ssub.s32 256, 256
          %142 = vsyncadd %s134, %s141
          %s143 = smul.addr %s139, 128
          %s144 = scalar_lea.hbm %s0, %s143
          %s145 = sshll.u32 %s137, 4
          %s146 = int_to_ptr.vmem [resolvable:$true] %s145
          %151 = dma.hbm_to_vmem [thread:$0]  %s144, 256, %s146, %s134, 128, 128, 8
        $region20: #{tpu_custom_call.1} parent=15 // pred_fallthru
          _
        // Predicated region
        $region21: #{tpu_custom_call.1} parent=15 // pred_check
          %p152 = pneg %p79
        $region22: #{tpu_custom_call.1} parent=15 // pred_check_branch
          %154 = sbr.rel (%p152) target = $region24
        $region23: #{tpu_custom_call.1} parent=15 // pred_region
          %s155 = sand.u32 %s69, 1
          %s156 = scalar_lea.sflag [#allocation7], %s155
          %s157 = sand.u32 %s69, 1
          %s158 = smul.addr %s157, 16
          %s159 = scalar_lea.vmem [#allocation6], %s158
          %s160 = sadd.s32 %s24, %s25
          %s161 = smul.u32 2, %s160
          %s163 = ssub.s32 256, 256
          %164 = vsyncadd %s156, %s163
          %s165 = smul.addr %s161, 128
          %s166 = scalar_lea.hbm %s1, %s165
          %s167 = sshll.u32 %s159, 4
          %s168 = int_to_ptr.vmem [resolvable:$true] %s167
          %173 = dma.hbm_to_vmem [thread:$0]  %s166, 256, %s168, %s156, 128, 128, 8
        $region24: #{tpu_custom_call.1} parent=15 // pred_fallthru
          _
      $region16: #{tpu_custom_call.1} parent=5 // pred_fallthru
        _
      %p174 = scmp.le.s32.totalorder 1, %s17
      %p175 = scmp.lt.s32.totalorder %s17, 3
      %p176 = pnand %p174, %p175
      %p177 = pneg %p176
      // Predicated region
      $region25: #{tpu_custom_call.1} parent=5 // pred_check
        _
      $region26: #{tpu_custom_call.1} parent=5 // pred_check_branch
        %179 = sbr.rel (%p176) target = $region28
      $region27: #{tpu_custom_call.1} parent=5 // pred_region
        %s180 = ssub.s32 %s17, 1
        %s181 = sand.u32 %s44, 1
        %s182 = scalar_lea.sflag [#allocation4], %s181
        %s183 = sand.u32 %s44, 1
        %s184 = smul.addr %s183, 16
        %s185 = scalar_lea.vmem [#allocation3], %s184
        // Predicated region
        $region29: #{tpu_custom_call.1} parent=27 // pred_check
          %p186 = pneg %p57
        $region30: #{tpu_custom_call.1} parent=27 // pred_check_branch
          %188 = sbr.rel (%p186) target = $region32
        $region31: #{tpu_custom_call.1} parent=27 // pred_region
          %189 = dma.done %s182, 256
        $region32: #{tpu_custom_call.1} parent=27 // pred_fallthru
          _
        %s190 = sand.u32 %s72, 1
        %s191 = scalar_lea.sflag [#allocation7], %s190
        %s192 = sand.u32 %s72, 1
        %s193 = smul.addr %s192, 16
        %s194 = scalar_lea.vmem [#allocation6], %s193
        // Predicated region
        $region33: #{tpu_custom_call.1} parent=27 // pred_check
          %p195 = pneg %p85
        $region34: #{tpu_custom_call.1} parent=27 // pred_check_branch
          %197 = sbr.rel (%p195) target = $region36
        $region35: #{tpu_custom_call.1} parent=27 // pred_region
          %198 = dma.done %s191, 256
        $region36: #{tpu_custom_call.1} parent=27 // pred_fallthru
          _
        %s199 = sand.u32 %s44, 1
        %s200 = scalar_lea.sflag [#allocation4], %s199
        %s201 = sand.u32 %s44, 1
        %s202 = smul.addr %s201, 16
        %s203 = scalar_lea.vmem [#allocation3], %s202
        %p204 = pneg %p57
        %p205 = pneg %p54
        %s206 = sand.u32 %s72, 1
        %s207 = scalar_lea.sflag [#allocation7], %s206
        %s208 = sand.u32 %s72, 1
        %s209 = smul.addr %s208, 16
        %s210 = scalar_lea.vmem [#allocation6], %s209
        %p211 = pneg %p85
        %p212 = pneg %p82
        %p213 = pneg %p111
        %p214 = pneg %p108
        %s215 = sand.u32 %s98, 1
        %s216 = scalar_lea.sflag [#allocation5], %s215
        %s217 = sand.u32 %s98, 1
        %s218 = smul.addr %s217, 8
        %s219 = scalar_lea.vmem [#allocation8], %s218
        %s220 = sadd.s32 %s26, %s27
        %s221 = smul.u32 2, %s220
        %s222 = sadd.s32 %s26, %s27
        %s223 = smul.u32 2, %s222
        %p224 = scmp.eq.s32.totalorder %s27, 0
        // Predicated region
        $region37: #{tpu_custom_call.1} parent=27 // pred_check
          %p225 = pneg %p224
        $region38: #{tpu_custom_call.1} parent=27 // pred_check_branch
          %227 = sbr.rel (%p225) target = $region40
        $region39: #{tpu_custom_call.1} parent=27 // pred_region
          %228 = vst [vmem:[#allocation2] sm:$0xff] 0.0
        $region40: #{tpu_custom_call.1} parent=27 // pred_fallthru
          _
        %v229 = vld [vmem:[%s185] sm:$0xff]
        %v230 = vld [vmem:[%s185 + $0x8] sm:$0xff]
        %v231 = vld [vmem:[%s194] sm:$0xff]
        %v232 = vld [vmem:[%s194 + $0x8] sm:$0xff]
        %v233 = vmul.f32 %v231, 2.0
        %v234 = vmul.f32 %v232, 2.0
        %v235 = vsub.f32 %v233, 1.0
        %v236 = vsub.f32 %v234, 1.0
        %v237 = vmul.f32 %v235, %v229
        %v238 = vmul.f32 %v236, %v230
        %vm239 = vcmp.lt.f32.partialorder %v237, -1.0
        %vm240 = vcmp.lt.f32.partialorder %v238, -1.0
        %v241 = vmul.f32 %v237, -4.0
        %v242 = vmul.f32 %v238, -4.0
        %v243 = vsub.f32 1.0, %v237
        %v244 = vsub.f32 1.0, %v238
        %v245 = vmul.f32 %v243, %v243
        %v246 = vmul.f32 %v244, %v244
        %v247 = vsel %vm239, %v241, %v245
        %v248 = vsel %vm240, %v242, %v246
        %s249 = sadd.s32 %s26, %s27
        %s250 = smul.u32 %s249, 16
        %v251 = vlaneseq
        %v252 = vshrl.u32 %v251, 7
        %v253 = vadd.s32 %v252, 8
        %v254 = vstv %s250
        %v255 = vadd.s32 %v254, %v252
        %v256 = vadd.s32 %v254, %v253
        %v257 = vlaneseq
        %v258 = vand.u32 %v257, 127
        %vm259 = vcmp.lt.s32.totalorder %v255, 16
        %vm260 = vcmp.lt.s32.totalorder %v256, 16
        %vm261 = vcmp.eq.s32.totalorder %v255, 16
        %vm262 = vcmp.eq.s32.totalorder %v256, 16
        %vm263 = vcmp.lt.s32.totalorder %v258, 0
        %vm264 = vmand %vm261, %vm263
        %vm265 = vmand %vm262, %vm263
        %vm266 = vmor %vm259, %vm264
        %vm267 = vmor %vm260, %vm265
        %v268 = vsel %vm266, %v247, 0.0
        %v269 = vsel %vm267, %v248, 0.0
        %v270 = vld [vmem:[#allocation2] sm:$0xff]
        %v271 = vadd.f32 %v268, %v269
        %v272 = vadd.f32 %v270, %v271
        %273 = vst [vmem:[#allocation2] sm:$0xff] %v272
        // Predicated region
        $region41: #{tpu_custom_call.1} parent=27 // pred_check
          %p274 = pneg %p224
        $region42: #{tpu_custom_call.1} parent=27 // pred_check_branch
          %276 = sbr.rel (%p274) target = $region44
        $region43: #{tpu_custom_call.1} parent=27 // pred_region
          %v277 = vld [vmem:[#allocation2] sm:$0xff]
          %278 = vst [vmem:[%s219] sm:$0xff] %v277
        $region44: #{tpu_custom_call.1} parent=27 // pred_fallthru
          _
        %s279 = sand.u32 %s98, 1
        %s280 = scalar_lea.sflag [#allocation5], %s279
        %s281 = sand.u32 %s98, 1
        %s282 = smul.addr %s281, 8
        %s283 = scalar_lea.vmem [#allocation8], %s282
        // Predicated region
        $region45: #{tpu_custom_call.1} parent=27 // pred_check
          %p284 = pneg %p108
        $region46: #{tpu_custom_call.1} parent=27 // pred_check_branch
          %286 = sbr.rel (%p284) target = $region48
        $region47: #{tpu_custom_call.1} parent=27 // pred_region
          %s288 = ssub.s32 128, 128
          %289 = vsyncadd %s280, %s288
          %s290 = smul.addr %s26, 128
          %s291 = scalar_lea.hbm %s2, %s290
          %s293 = sshll.u32 %s283, 4
          %s294 = int_to_ptr.vmem [resolvable:$true] %s293
          %296 = dma.vmem_to_hbm [thread:$0]  %s294, 128, %s291, %s280
        $region48: #{tpu_custom_call.1} parent=27 // pred_fallthru
          _
      $region28: #{tpu_custom_call.1} parent=5 // pred_fallthru
        _
      %p297 = scmp.le.s32.totalorder 2, %s17
      // Predicated region
      $region49: #{tpu_custom_call.1} parent=5 // pred_check
        %p298 = pneg %p297
      $region50: #{tpu_custom_call.1} parent=5 // pred_check_branch
        %300 = sbr.rel (%p298) target = $region52
      $region51: #{tpu_custom_call.1} parent=5 // pred_region
        %s301 = ssub.s32 %s17, 2
        // Predicated region
        $region53: #{tpu_custom_call.1} parent=51 // pred_check
          %p302 = pneg %p114
        $region54: #{tpu_custom_call.1} parent=51 // pred_check_branch
          %304 = sbr.rel (%p302) target = $region56
        $region55: #{tpu_custom_call.1} parent=51 // pred_region
          %s305 = sand.u32 %s99, 1
          %s306 = scalar_lea.sflag [#allocation5], %s305
          %s307 = sand.u32 %s99, 1
          %s308 = smul.addr %s307, 8
          %s309 = scalar_lea.vmem [#allocation8], %s308
          %310 = dma.done %s306, 128
        $region56: #{tpu_custom_call.1} parent=51 // pred_fallthru
          _
      $region52: #{tpu_custom_call.1} parent=5 // pred_fallthru
        _
    $region6: #{tpu_custom_call.1} parent=1 // loop_footer
      %s21 = sadd.s32 1, %s17
    $region7: #{tpu_custom_call.1} parent=1 // loop_footer_branch
      %16 = sbr.rel target = $region3
    $region8: #{tpu_custom_call.1} parent=1 // loop_exit
      _
    %311 = vsyncpa [#allocation4], 1
    %s312 = scalar_lea.sflag [#allocation4], 1
    %313 = vsyncpa %s312, 1
    %314 = vsyncpa [#allocation7], 1
    %s315 = scalar_lea.sflag [#allocation7], 1
    %316 = vsyncpa %s315, 1
    %317 = vsyncpa [#allocation5], 1
    %s318 = scalar_lea.sflag [#allocation5], 1
    %319 = vsyncpa %s318, 1

</llo_original>
